<compile_context>
chip_gen: v6e
topology: v6e:2x2x1
jax: 0.10.0
libtpu: 0.0.40
codegen_flags: <defaults>
</compile_context>

<pallas_src>
import jax
import jax.numpy as jnp
from jax.experimental import pallas as pl
from jax.experimental.pallas import tpu as pltpu


def _round_up(x: int, m: int) -> int:
    return ((x + m - 1) // m) * m


def word_embedding_kernel(ids_ref, keep_ref, emb_ref, out_ref):
    """One token tile.

    ids_ref : (T, 1)  int32        token ids (clipped to [0, V-1]; padded tail -> 0)
    keep_ref: (T, 1)  table dtype  exactly 1.0 where pos < query_len else 0.0
    emb_ref : (Vp, E) table dtype  VMEM-resident embedding table (constant block index)
    out_ref : (T, E)  table dtype  masked embeddings (single lane-dense store)
    """
    ids = ids_ref[...]                       # (T, 1) int32
    keep = keep_ref[...]                     # (T, 1) exactly 0.0 / 1.0
    table = emb_ref[...]                     # (Vp, E)
    t = ids.shape[0]
    vp = table.shape[0]
    vocab = jax.lax.broadcasted_iota(jnp.int32, (t, vp), 1)
    # Length mask folded into the one-hot: masked tokens -> all-zero row -> exact zeros.
    onehot = jnp.where(ids == vocab, keep, jnp.zeros((), keep.dtype))
    out_ref[...] = jnp.dot(
        onehot, table, preferred_element_type=jnp.float32
    ).astype(out_ref.dtype)


def word_embedding(queries, query_lens, embed_weight, *, max_tile=512):
    """queries: (B, Tq) int; query_lens: (B,) int; embed_weight: (V, E) float.
    Returns (B, Tq, E): embedding lookup with positions >= query_lens zeroed."""
    queries = jnp.asarray(queries, jnp.int32)
    lens = jnp.asarray(query_lens, jnp.int32).reshape(-1)
    embed_weight = jnp.asarray(embed_weight)
    B, Tq = queries.shape
    V, E = embed_weight.shape
    dt = embed_weight.dtype
    item = jnp.dtype(dt).itemsize

    # --- VMEM-resident table (small/medium vocab path). -------------------------
    v_pad = _round_up(V, 128)                 # lane-dense one-hot + full MXU contraction
    table_bytes = v_pad * E * item
    # Budget accounts for Pallas double-buffering the input block and for v7x's
    # 64 MiB physical VMEM.
    assert table_bytes <= (16 << 20), (
        "TODO(synk): vocab too large for VMEM residency; needs the HBM row-gather "
        "path (coalesced aggregate wait + double buffering), not implemented.")
    table = embed_weight if v_pad == V else jnp.pad(embed_weight, ((0, v_pad - V), (0, 0)))

    # --- Flatten (B, Tq) into one token axis; pick a large tile that divides it. --
    n = B * Tq
    n_pad = _round_up(n, 8)
    onehot_cap = max(8, (((4 << 20) // (v_pad * item)) // 8) * 8)   # bound (T, Vp) scratch
    t_tile = max(8, (min(n_pad, max_tile, onehot_cap) // 8) * 8)
    while n_pad % t_tile:                     # multiple of 8 always divides n_pad
        t_tile -= 8

    ids = jnp.clip(queries.reshape(-1), 0, V - 1)   # nn.Embedding would raise on OOB ids
    # Same comparison as the module (pos < query_len), over (B, Tq) scalar metadata.
    keep = (jnp.arange(Tq, dtype=jnp.int32)[None, :] < lens[:, None]).astype(dt).reshape(-1)
    if n_pad != n:
        ids = jnp.pad(ids, (0, n_pad - n))
        keep = jnp.pad(keep, (0, n_pad - n))        # padded tail is masked to zero
    ids = ids.reshape(n_pad, 1)
    keep = keep.reshape(n_pad, 1)

    # VMEM: 2x table (double-buffered input) + out tiles + id/mask tiles + one-hot scratch.
    est = (2 * table_bytes + 4 * t_tile * E * item + 4 * t_tile * 128 * 4
           + 2 * t_tile * v_pad * max(item, 4) + (2 << 20))
    vmem_limit = int(min(48 << 20, max(32 << 20, est)))

    out = pl.pallas_call(
        word_embedding_kernel,
        out_shape=jax.ShapeDtypeStruct((n_pad, E), dt),
        grid=(n_pad // t_tile,),
        in_specs=[
            pl.BlockSpec((t_tile, 1), lambda i: (i, 0)),    # token ids
            pl.BlockSpec((t_tile, 1), lambda i: (i, 0)),    # keep mask (exactly 0/1)
            pl.BlockSpec((v_pad, E), lambda i: (0, 0)),     # table: fetched once, resident
        ],
        out_specs=pl.BlockSpec((t_tile, E), lambda i: (i, 0)),
        compiler_params=pltpu.CompilerParams(
            dimension_semantics=("parallel",),              # token tiles across cores (v7x)
            vmem_limit_bytes=vmem_limit,
        ),
    )(ids, keep, table)

    if n_pad != n:                                          # only when B*Tq % 8 != 0
        out = out[:n]
    return out.reshape(B, Tq, E)


if __name__ == "__main__":
    # Shapes consistent with the module: batch=2, query_max_len=8, num_word=64, embed_dim=128.
    B, Tq, V, E = 2, 8, 64, 128

    key = jax.random.PRNGKey(0)
    k_emb, k_q = jax.random.split(key)

    # kaiming_uniform_-style init: bound = sqrt(6 / fan_in), fan_in = embed_dim.
    bound = float(jnp.sqrt(6.0 / E))
    embed_weight = jax.random.uniform(k_emb, (V, E), jnp.float32, -bound, bound)
    # Demo weights rounded to bf16-representable values so the check below isolates
    # gather/mask correctness from MXU f32 accumulation details.
    embed_weight = embed_weight.astype(jnp.bfloat16).astype(jnp.float32)

    queries = jax.random.randint(k_q, (B, Tq), 0, V, dtype=jnp.int32)
    query_lens = jnp.array([5, 8], dtype=jnp.int32)

    out = jax.block_until_ready(word_embedding(queries, query_lens, embed_weight))

    # Pure-JAX reference: lookup + length mask (matches WordEmbedding.forward).
    ref = jnp.take(embed_weight, queries, axis=0)
    ref = ref * (jnp.arange(Tq)[None, :] < query_lens[:, None])[:, :, None].astype(ref.dtype)

    assert out.shape == (B, Tq, E) and out.dtype == embed_weight.dtype
    assert jnp.all(out[0, 5:, :] == 0.0), "masked positions must be exactly zero"
    assert jnp.allclose(out, ref, atol=1e-6, rtol=1e-6), "mismatch vs reference"
    print("KERNEL_OK")
</pallas_src>

<mosaic_0001>
module attributes {stable_mosaic.version = 11 : i64} {
  func.func @word_embedding_kernel(%arg0: i32, %arg1: memref<16x1xi32, #tpu.memory_space<vmem>>, %arg2: memref<16x1xf32, #tpu.memory_space<vmem>>, %arg3: memref<128x128xf32, #tpu.memory_space<vmem>>, %arg4: memref<16x128xf32, #tpu.memory_space<vmem>>) attributes {dimension_semantics = [#tpu.dimension_semantics<parallel>], iteration_bounds = array<i64: 1>, scalar_prefetch = 0 : i64, scratch_operands = 0 : i64, tpu.core_type = #tpu.core_type<tc>, window_params = [{transform_indices = @transform_0, window_bounds = array<i64: 16, 1>}, {transform_indices = @transform_1, window_bounds = array<i64: 16, 1>}, {pipeline_mode = #tpu.pipeline_mode<synchronous>, transform_indices = @transform_2, window_bounds = array<i64: 128, 128>}, {transform_indices = @transform_3, window_bounds = array<i64: 16, 128>}]} {
    %c0 = arith.constant 0 : index
    %c0_0 = arith.constant 0 : index
    %0 = vector.load %arg1[%c0, %c0_0] : memref<16x1xi32, #tpu.memory_space<vmem>>, vector<16x1xi32>
    %c0_1 = arith.constant 0 : index
    %c0_2 = arith.constant 0 : index
    %1 = vector.load %arg2[%c0_1, %c0_2] : memref<16x1xf32, #tpu.memory_space<vmem>>, vector<16x1xf32>
    %c0_3 = arith.constant 0 : index
    %c0_4 = arith.constant 0 : index
    %2 = vector.load %arg3[%c0_3, %c0_4] : memref<128x128xf32, #tpu.memory_space<vmem>>, vector<128x128xf32>
    %3 = tpu.iota {dimensions = array<i32: 1>} : vector<16x128xi32>
    %4 = vector.broadcast %0 : vector<16x1xi32> to vector<16x128xi32>
    %5 = arith.cmpi eq, %4, %3 : vector<16x128xi32>
    %cst = arith.constant 0.000000e+00 : f32
    %6 = vector.shape_cast %1 : vector<16x1xf32> to vector<16x1xf32>
    %7 = vector.broadcast %6 : vector<16x1xf32> to vector<16x128xf32>
    %8 = vector.broadcast %cst : f32 to vector<16x128xf32>
    %9 = arith.select %5, %7, %8 : vector<16x128xi1>, vector<16x128xf32>
    %cst_5 = arith.constant dense<0.000000e+00> : vector<16x128xf32>
    %10 = tpu.matmul %9, %2, %cst_5 {dimension_numbers = #tpu.dot_dimension_numbers<[1], [0], [0], [1], [0, 0, 1, 1], [], []>} : vector<16x128xf32>, vector<128x128xf32>, vector<16x128xf32> -> vector<16x128xf32>
    %c0_6 = arith.constant 0 : index
    %c0_7 = arith.constant 0 : index
    %11 = vector.load %arg4[%c0_6, %c0_7] : memref<16x128xf32, #tpu.memory_space<vmem>>, vector<16x128xf32>
    tpu.vector_store %arg4[%c0_6, %c0_7], %10 {strides = array<i32>} : memref<16x128xf32, #tpu.memory_space<vmem>>, vector<16x128xf32>,
    return
  }
  func.func @transform_0(%arg0: i32) -> (i32, i32) {
    %c0_i32 = arith.constant 0 : i32
    %c0_i32_0 = arith.constant 0 : i32
    return %arg0, %c0_i32 : i32, i32
  }
  func.func @transform_1(%arg0: i32) -> (i32, i32) {
    %c0_i32 = arith.constant 0 : i32
    %c0_i32_0 = arith.constant 0 : i32
    return %arg0, %c0_i32 : i32, i32
  }
  func.func @transform_2(%arg0: i32) -> (i32, i32) {
    %c0_i32 = arith.constant 0 : i32
    %c0_i32_0 = arith.constant 0 : i32
    %c0_i32_1 = arith.constant 0 : i32
    return %c0_i32, %c0_i32_0 : i32, i32
  }
  func.func @transform_3(%arg0: i32) -> (i32, i32) {
    %c0_i32 = arith.constant 0 : i32
    %c0_i32_0 = arith.constant 0 : i32
    return %arg0, %c0_i32 : i32, i32
  }
}

</mosaic_0001>

<llo_original>
// kernel: tpu_custom_call.1
$region0: #{tpu_custom_call.1}
  #allocation0 [shape = 'u32[]', space=smem, size = 0x4, offset = 0x4, fixed_abs, tag = 'smem constant byte address 0x4 - core index']
  #allocation1 [shape = 'u32[144,128]{1,0:T(1,128)}', space=vmem, size = 0x12000, scoped, tag = 'internal scratch']
  %s0 = inlined_call_operand.vmem [shape: s32[16,1], index: 0, kind: input, shape index: {}]
  %s1 = inlined_call_operand.vmem [shape: f32[16,1], index: 1, kind: input, shape index: {}]
  %s2 = inlined_call_operand.hbm [shape: f32[128,128], index: 2, kind: input, shape index: {}]
  %s3 = inlined_call_operand.hbm [shape: f32[16,128], index: 3, kind: output, shape index: {}]
  %s4 = sld [smem:[#allocation0]]
  $region26: #{tpu_custom_call.1} parent=0
    _
  %s6 = ssub.s32 1, %s4
  %s7 = scalar_select 0, %s6, %s4
  $region1: #{tpu_custom_call.1} parent=0
    #allocation2 [shape = 'u8[65536]{0}', space=vmem, size = 0x10000, scoped, tag = 'input window, operand 2, single buffered']
    #allocation3 [shape = 's32[1]{0}', space=sflag, size = 0x4, scoped, tag = 'scoped memory for tpu_custom_call.1']
    #allocation4 [shape = 's32[1]{0}', space=sflag, size = 0x4, scoped, tag = 'scoped memory for tpu_custom_call.1']
    #allocation5 [shape = 'u8[8192]{0}', space=vmem, size = 0x2000, scoped, tag = 'output window, operand 0, single buffered']
    %8 = vsyncpa [#allocation3], 0
    %9 = vsyncpa [#allocation4], 0
    // Predicated region
    $region2: #{tpu_custom_call.1} parent=1 // pred_check
      _
    $region3: #{tpu_custom_call.1} parent=1 // pred_check_branch
      %11 = sbr.rel (0) target = $region5
    $region4: #{tpu_custom_call.1} parent=1 // pred_region
      _
    $region5: #{tpu_custom_call.1} parent=1 // pred_fallthru
      _
    // Predicated region
    $region6: #{tpu_custom_call.1} parent=1 // pred_check
      _
    $region7: #{tpu_custom_call.1} parent=1 // pred_check_branch
      %13 = sbr.rel (0) target = $region9
    $region8: #{tpu_custom_call.1} parent=1 // pred_region
      _
    $region9: #{tpu_custom_call.1} parent=1 // pred_fallthru
      _
    // Predicated region
    $region10: #{tpu_custom_call.1} parent=1 // pred_check
      _
    $region11: #{tpu_custom_call.1} parent=1 // pred_check_branch
      %15 = sbr.rel (0) target = $region13
    $region12: #{tpu_custom_call.1} parent=1 // pred_region
      %s17 = ssub.s32 2048, 2048
      %18 = vsyncadd [#allocation3], %s17
      %s19 = sshll.u32 [#allocation2], 4
      %s20 = int_to_ptr.vmem [resolvable:$true] %s19
      %25 = dma.hbm_to_vmem [thread:$0]  %s2, 2048, %s20, [#allocation3], 128, 128, 8
    $region13: #{tpu_custom_call.1} parent=1 // pred_fallthru
      _
    // Predicated region
    $region14: #{tpu_custom_call.1} parent=1 // pred_check
      _
    $region15: #{tpu_custom_call.1} parent=1 // pred_check_branch
      %27 = sbr.rel (0) target = $region17
    $region16: #{tpu_custom_call.1} parent=1 // pred_region
      %28 = dma.done [#allocation3], 2048
    $region17: #{tpu_custom_call.1} parent=1 // pred_fallthru
      _
    %v29 = vld [vmem:[%s0] sm:$0xff]
    %v30 = vld [vmem:[%s0 + $0x8] sm:$0xff]
    %v31 = vld [vmem:[%s1] sm:$0xff]
    %v32 = vld [vmem:[%s1 + $0x8] sm:$0xff]
    %v33 = vld [vmem:[#allocation2] sm:$0xff]
    %v34 = vld [vmem:[#allocation2 + $0x8] sm:$0xff]
    %v35 = vld [vmem:[#allocation2 + $0x10] sm:$0xff]
    %v36 = vld [vmem:[#allocation2 + $0x18] sm:$0xff]
    %v37 = vld [vmem:[#allocation2 + $0x20] sm:$0xff]
    %v38 = vld [vmem:[#allocation2 + $0x28] sm:$0xff]
    %v39 = vld [vmem:[#allocation2 + $0x30] sm:$0xff]
    %v40 = vld [vmem:[#allocation2 + $0x38] sm:$0xff]
    %v41 = vld [vmem:[#allocation2 + $0x40] sm:$0xff]
    %v42 = vld [vmem:[#allocation2 + $0x48] sm:$0xff]
    %v43 = vld [vmem:[#allocation2 + $0x50] sm:$0xff]
    %v44 = vld [vmem:[#allocation2 + $0x58] sm:$0xff]
    %v45 = vld [vmem:[#allocation2 + $0x60] sm:$0xff]
    %v46 = vld [vmem:[#allocation2 + $0x68] sm:$0xff]
    %v47 = vld [vmem:[#allocation2 + $0x70] sm:$0xff]
    %v48 = vld [vmem:[#allocation2 + $0x78] sm:$0xff]
    %v49 = vlaneseq
    %v50 = vand.u32 %v49, 127
    %51 = vset.pattern.permute.xlu0 0
    %52 = vperm.xlu0 %51, %v29
    %v53 = vpop.permute.xlu0 %52
    %54 = vset.pattern.permute.xlu0 0
    %55 = vperm.xlu0 %54, %v30
    %v56 = vpop.permute.xlu0 %55
    %vm57 = vcmp.eq.s32.totalorder %v53, %v50
    %vm58 = vcmp.eq.s32.totalorder %v56, %v50
    %60 = vset.pattern.permute.xlu0 0
    %61 = vperm.xlu0 %60, %v31
    %v62 = vpop.permute.xlu0 %61
    %65 = vset.pattern.permute.xlu0 0
    %66 = vperm.xlu0 %65, %v32
    %v67 = vpop.permute.xlu0 %66
    %v69 = vsel %vm57, %v62, 0.0
    %v70 = vsel %vm58, %v67, 0.0
    %71 = vmatprep.subr.mxu0 0.0
    %72 = vmatpush1.msra.mxu0 %v48
    %73 = vmatprep.subr.mxu0 0.0
    %74 = vmatpush1.msra.mxu0 %v47
    %75 = vmatprep.subr.mxu0 0.0
    %76 = vmatpush1.msra.mxu0 %v46
    %77 = vmatprep.subr.mxu0 0.0
    %78 = vmatpush1.msra.mxu0 %v45
    %79 = vmatprep.subr.mxu0 0.0
    %80 = vmatpush1.msra.mxu0 %v44
    %81 = vmatprep.subr.mxu0 0.0
    %82 = vmatpush1.msra.mxu0 %v43
    %83 = vmatprep.subr.mxu0 0.0
    %84 = vmatpush1.msra.mxu0 %v42
    %85 = vmatprep.subr.mxu0 0.0
    %86 = vmatpush1.msra.mxu0 %v41
    %87 = vmatprep.subr.mxu0 0.0
    %88 = vmatpush1.msra.mxu0 %v40
    %89 = vmatprep.subr.mxu0 0.0
    %90 = vmatpush1.msra.mxu0 %v39
    %91 = vmatprep.subr.mxu0 0.0
    %92 = vmatpush1.msra.mxu0 %v38
    %93 = vmatprep.subr.mxu0 0.0
    %94 = vmatpush1.msra.mxu0 %v37
    %95 = vmatprep.subr.mxu0 0.0
    %96 = vmatpush1.msra.mxu0 %v36
    %97 = vmatprep.subr.mxu0 0.0
    %98 = vmatpush1.msra.mxu0 %v35
    %99 = vmatprep.subr.mxu0 0.0
    %100 = vmatpush1.msra.mxu0 %v34
    %101 = vmatprep.subr.mxu0 0.0
    %102 = vmatpush1.msra.mxu0 %v33
    %103 = vmatprep.subr.mxu0 0.0
    %104 = vmatpush2.msra.mxu0 0.0
    %105 = vmatprep.subr.mxu0 0.0
    %106 = vmatpush2.msra.mxu0 0.0
    %107 = vmatprep.subr.mxu0 0.0
    %108 = vmatpush2.msra.mxu0 0.0
    %109 = vmatprep.subr.mxu0 0.0
    %110 = vmatpush2.msra.mxu0 0.0
    %111 = vmatprep.subr.mxu0 0.0
    %112 = vmatpush2.msra.mxu0 0.0
    %113 = vmatprep.subr.mxu0 0.0
    %114 = vmatpush2.msra.mxu0 0.0
    %115 = vmatprep.subr.mxu0 0.0
    %116 = vmatpush2.msra.mxu0 0.0
    %117 = vmatprep.subr.mxu0 0.0
    %118 = vmatpush2.msra.mxu0 0.0
    %119 = vmatprep.subr.mxu0 0.0
    %120 = vmatpush2.msra.mxu0 0.0
    %121 = vmatprep.subr.mxu0 0.0
    %122 = vmatpush2.msra.mxu0 0.0
    %123 = vmatprep.subr.mxu0 0.0
    %124 = vmatpush2.msra.mxu0 0.0
    %125 = vmatprep.subr.mxu0 0.0
    %126 = vmatpush2.msra.mxu0 0.0
    %127 = vmatprep.subr.mxu0 0.0
    %128 = vmatpush2.msra.mxu0 0.0
    %129 = vmatprep.subr.mxu0 0.0
    %130 = vmatpush2.msra.mxu0 0.0
    %131 = vmatprep.subr.mxu0 0.0
    %132 = vmatpush2.msra.mxu0 0.0
    %133 = vmatprep.subr.mxu0 0.0
    %134 = vmatpush2.msra.mxu0 0.0
    %135 = vmatprep.mubr.f32.mxu0 0.0
    %136 = vmatmul.mubr.f32.gmra.mxu0 %v69
    %v137 = vpop.f32.mrf.mxu0
    %v138 = vadd.f32 0.0, %v137
    %v139 = vpop.f32.mrf.mxu0
    %140 = vmatprep.mubr.f32.mxu0 0.0
    %141 = vmatmul.mubr.f32.gmra.mxu0 %v70
    %v142 = vpop.f32.mrf.mxu0
    %v143 = vadd.f32 0.0, %v142
    %v144 = vpop.f32.mrf.mxu0
    %145 = vdwg.mxu0
    %146 = vst [vmem:[#allocation5] sm:$0xff] %v138
    %147 = vst [vmem:[#allocation5 + $0x8] sm:$0xff] %v143
    // Predicated region
    $region18: #{tpu_custom_call.1} parent=1 // pred_check
      _
    $region19: #{tpu_custom_call.1} parent=1 // pred_check_branch
      %149 = sbr.rel (0) target = $region21
    $region20: #{tpu_custom_call.1} parent=1 // pred_region
      %s151 = ssub.s32 256, 256
      %152 = vsyncadd [#allocation4], %s151
      %s153 = sshll.u32 [#allocation5], 4
      %s154 = int_to_ptr.vmem [resolvable:$true] %s153
      %159 = dma.vmem_to_hbm [thread:$0]  %s154, 256, %s3, [#allocation4], 128, 128, 8
    $region21: #{tpu_custom_call.1} parent=1 // pred_fallthru
      _
    // Predicated region
    $region22: #{tpu_custom_call.1} parent=1 // pred_check
      _
    $region23: #{tpu_custom_call.1} parent=1 // pred_check_branch
      %161 = sbr.rel (0) target = $region25
    $region24: #{tpu_custom_call.1} parent=1 // pred_region
      %162 = dma.done [#allocation4], 256
    $region25: #{tpu_custom_call.1} parent=1 // pred_fallthru
      _
    %163 = vsyncpa [#allocation3], 1
    %164 = vsyncpa [#allocation4], 1

</llo_original>
